<compile_context>
chip_gen: v7x
topology: tpu7x:2x2x1
jax: 0.10.0
libtpu: 0.0.40
codegen_flags: <defaults>
</compile_context>

<pallas_src>
import jax
import jax.numpy as jnp
from jax.experimental import pallas as pl
from jax.experimental.pallas import tpu as pltpu

_CANDIDATE_LANES = (1024, 512, 256, 128)   # lane-dense (multiple of 128 -> unmasked vst)
_MAX_BLOCK_BYTES = 8 * 1024 * 1024          # 8 MiB/block; x2 (in+out) x2 (double-buf) = 32 MiB
_VMEM_LIMIT_BYTES = 48 * 1024 * 1024        # headroom under v7x 64 MiB per-TC VMEM


def _copy_kernel(x_ref, o_ref):
    # Base-class Task.forward has no defined computation; pass-through.
    # TODO(synk): concrete subclasses must override this body with real compute
    #             (populate_modules / forward are abstract in the reference).
    o_ref[...] = x_ref[...]


def _pick_lanes(total: int):
    for lanes in _CANDIDATE_LANES:
        if total % lanes == 0:
            return lanes
    return None


def _pick_tile_rows(rows: int, lanes: int, itemsize: int) -> int:
    # Largest block <= _MAX_BLOCK_BYTES with rows a multiple of 32 (keeps
    # unmasked packed stores for bf16 / int8 if dtypes change).
    by_bytes = _MAX_BLOCK_BYTES // (lanes * itemsize)
    by_bytes = max(32, (by_bytes // 32) * 32)
    tile = min(by_bytes, rows)
    if tile == rows and rows >= 16:
        # Single-step grid would leave one v7x TensorCore idle; split in two,
        # keeping the block a multiple of 8 rows so lowering stays unmasked.
        half = ((rows // 2) // 8) * 8
        if half >= 8:
            tile = half
    return tile


def task_forward_pallas(x: jax.Array) -> jax.Array:
    """Pallas copy-kernel template for the abstract base Task's forward.

    Runs the input through a lane-dense tiled identity kernel.  Kept only as
    the hot-path scaffold a concrete subclass would fill with real compute;
    the production base-class forward should use the zero-traffic identity
    (see TaskPallas.forward).
    """
    orig_shape = x.shape
    total = x.size
    if total == 0:
        return x

    lanes = _pick_lanes(total)
    if lanes is None:
        # No 128-multiple lane width divides the element count.  Padding +
        # slicing would cost two extra full HBM passes, so just return x
        # (identical semantics for the base-class pass-through).
        return x

    rows = total // lanes
    slab = x.reshape(rows, lanes)

    itemsize = jnp.dtype(x.dtype).itemsize
    tile_rows = _pick_tile_rows(rows, lanes, itemsize)

    out = pl.pallas_call(
        _copy_kernel,
        out_shape=jax.ShapeDtypeStruct((rows, lanes), x.dtype),
        grid=(pl.cdiv(rows, tile_rows),),
        in_specs=[pl.BlockSpec((tile_rows, lanes), lambda i: (i, 0))],
        out_specs=pl.BlockSpec((tile_rows, lanes), lambda i: (i, 0)),
        compiler_params=pltpu.CompilerParams(
            dimension_semantics=("parallel",),
            vmem_limit_bytes=_VMEM_LIMIT_BYTES,
        ),
    )(slab)

    return out.reshape(orig_shape)


class TaskPallas:
    """Minimal JAX-side mirror of the PyTorch Task base class."""

    def __init__(self, **kwargs):
        self.kwargs = kwargs
        # nn.Parameter(torch.empty(0)) -> zero-element parameter, deterministic.
        self.device_indicator_param = jnp.zeros((0,), dtype=jnp.float32)
        self.populate_modules()

    @property
    def device(self):
        # Single device (matches the PyTorch device_indicator_param idiom).
        return next(iter(self.device_indicator_param.devices()))

    def populate_modules(self):
        # TODO(synk): abstract method — no modules defined in the base class.
        pass

    def forward(self, x, *, use_pallas_template: bool = False):
        """Base-class forward: no defined computation -> identity.

        The zero-traffic identity is the optimal base-class behaviour; the
        Pallas copy kernel is only exercised when a caller explicitly asks for
        the subclass template path.
        """
        if not use_pallas_template:
            return x
        return task_forward_pallas(x)

    def get_metrics_dict(self, metrics_dict, outputs, batch):
        # TODO(synk): abstract method in the reference class; no Pallas equivalent.
        raise NotImplementedError

    def get_loss_dict(self, loss_dict, outputs, batch, metrics_dict=None):
        # TODO(synk): abstract method in the reference class; no Pallas equivalent.
        raise NotImplementedError


if __name__ == "__main__":
    key = jax.random.PRNGKey(0)
    # Small NCHW input consistent with a typical task model input.
    x = jax.random.normal(key, (2, 4, 16, 16), dtype=jnp.float32)

    task = TaskPallas()

    # Default (optimized) base-class forward: zero-traffic identity.
    out_fast = task.forward(x)
    assert out_fast.shape == x.shape and out_fast.dtype == x.dtype

    # Pallas subclass-template kernel path: run once and verify on device.
    out_kernel = task.forward(x, use_pallas_template=True)
    out_kernel = jax.block_until_ready(out_kernel)

    assert out_kernel.shape == x.shape and out_kernel.dtype == x.dtype
    assert bool(jnp.all(out_kernel == x))
    assert bool(jnp.all(out_fast == x))
    assert task.device_indicator_param.shape == (0,)

    print("KERNEL_OK")
</pallas_src>

<mosaic_0001>
module attributes {stable_mosaic.version = 11 : i64} {
  func.func @_copy_kernel(%arg0: i32, %arg1: memref<2x1024xf32, #tpu.memory_space<vmem>>, %arg2: memref<2x1024xf32, #tpu.memory_space<vmem>>) attributes {dimension_semantics = [#tpu.dimension_semantics<parallel>], iteration_bounds = array<i64: 1>, scalar_prefetch = 0 : i64, scratch_operands = 0 : i64, tpu.core_type = #tpu.core_type<tc>, window_params = [{transform_indices = @transform_0, window_bounds = array<i64: 2, 1024>}, {transform_indices = @transform_1, window_bounds = array<i64: 2, 1024>}]} {
    %c0 = arith.constant 0 : index
    %c0_0 = arith.constant 0 : index
    %0 = vector.load %arg1[%c0, %c0_0] : memref<2x1024xf32, #tpu.memory_space<vmem>>, vector<2x1024xf32>
    %c0_1 = arith.constant 0 : index
    %c0_2 = arith.constant 0 : index
    %1 = vector.load %arg2[%c0_1, %c0_2] : memref<2x1024xf32, #tpu.memory_space<vmem>>, vector<2x1024xf32>
    tpu.vector_store %arg2[%c0_1, %c0_2], %0 {strides = array<i32>} : memref<2x1024xf32, #tpu.memory_space<vmem>>, vector<2x1024xf32>,
    return
  }
  func.func @transform_0(%arg0: i32) -> (i32, i32) {
    %c0_i32 = arith.constant 0 : i32
    %c0_i32_0 = arith.constant 0 : i32
    return %arg0, %c0_i32 : i32, i32
  }
  func.func @transform_1(%arg0: i32) -> (i32, i32) {
    %c0_i32 = arith.constant 0 : i32
    %c0_i32_0 = arith.constant 0 : i32
    return %arg0, %c0_i32 : i32, i32
  }
}

</mosaic_0001>

<llo_original>
// kernel: tpu_custom_call.1
$region0: #{tpu_custom_call.1}
  #allocation0 [shape = 'u32[]', space=smem, size = 0x4, offset = 0x4, fixed_abs, tag = 'smem constant byte address 0x4 - core index']
  #allocation1 [shape = 'u32[144,128]{1,0:T(1,128)}', space=vmem, size = 0x12000, scoped, tag = 'internal scratch']
  %s0 = inlined_call_operand.hbm [shape: f32[2,1024], index: 0, kind: input, shape index: {}]
  %s1 = inlined_call_operand.hbm [shape: f32[2,1024], index: 1, kind: output, shape index: {}]
  %s2 = sld [smem:[#allocation0]]
  $region18: #{tpu_custom_call.1} parent=0
    _
  %s4 = ssub.s32 1, %s2
  %s5 = scalar_select 0, %s4, %s2
  $region1: #{tpu_custom_call.1} parent=0
    #allocation2 [shape = 'u8[8192]{0}', space=vmem, size = 0x2000, scoped, tag = 'input window, operand 0, single buffered']
    #allocation3 [shape = 's32[1]{0}', space=sflag, size = 0x4, scoped, tag = 'scoped memory for tpu_custom_call.1']
    #allocation4 [shape = 's32[1]{0}', space=sflag, size = 0x4, scoped, tag = 'scoped memory for tpu_custom_call.1']
    #allocation5 [shape = 'u8[8192]{0}', space=vmem, size = 0x2000, scoped, tag = 'output window, operand 0, single buffered']
    %6 = vsyncpa [#allocation3], 0
    %7 = vsyncpa [#allocation4], 0
    // Predicated region
    $region2: #{tpu_custom_call.1} parent=1 // pred_check
      _
    $region3: #{tpu_custom_call.1} parent=1 // pred_check_branch
      %9 = sbr.rel (0) target = $region5
    $region4: #{tpu_custom_call.1} parent=1 // pred_region
      %s11 = ssub.s32 256, 256
      %12 = vsyncadd [#allocation3], %s11
      %s14 = sshll.u32 [#allocation2], 4
      %s15 = int_to_ptr.vmem [resolvable:$true] %s14
      %17 = dma.hbm_to_vmem [thread:$0]  %s0, 256, %s15, [#allocation3]
    $region5: #{tpu_custom_call.1} parent=1 // pred_fallthru
      _
    // Predicated region
    $region6: #{tpu_custom_call.1} parent=1 // pred_check
      _
    $region7: #{tpu_custom_call.1} parent=1 // pred_check_branch
      %19 = sbr.rel (0) target = $region9
    $region8: #{tpu_custom_call.1} parent=1 // pred_region
      %20 = dma.done [#allocation3], 256
    $region9: #{tpu_custom_call.1} parent=1 // pred_fallthru
      _
    %v21 = vld [vmem:[#allocation2] sm:$0xff]
    %v22 = vld [vmem:[#allocation2 + $0x8] sm:$0xff]
    %23 = vst [vmem:[#allocation5] sm:$0xff] %v21
    %24 = vst [vmem:[#allocation5 + $0x8] sm:$0xff] %v22
    // Predicated region
    $region10: #{tpu_custom_call.1} parent=1 // pred_check
      _
    $region11: #{tpu_custom_call.1} parent=1 // pred_check_branch
      %26 = sbr.rel (0) target = $region13
    $region12: #{tpu_custom_call.1} parent=1 // pred_region
      %s28 = ssub.s32 256, 256
      %29 = vsyncadd [#allocation4], %s28
      %s31 = sshll.u32 [#allocation5], 4
      %s32 = int_to_ptr.vmem [resolvable:$true] %s31
      %34 = dma.vmem_to_hbm [thread:$0]  %s32, 256, %s1, [#allocation4]
    $region13: #{tpu_custom_call.1} parent=1 // pred_fallthru
      _
    // Predicated region
    $region14: #{tpu_custom_call.1} parent=1 // pred_check
      _
    $region15: #{tpu_custom_call.1} parent=1 // pred_check_branch
      %36 = sbr.rel (0) target = $region17
    $region16: #{tpu_custom_call.1} parent=1 // pred_region
      %37 = dma.done [#allocation4], 256
    $region17: #{tpu_custom_call.1} parent=1 // pred_fallthru
      _
    %38 = vsyncpa [#allocation3], 1
    %39 = vsyncpa [#allocation4], 1

</llo_original>
